<compile_context>
chip_gen: v7x
topology: tpu7x:2x2x1
jax: 0.10.0
libtpu: 0.0.40
codegen_flags: <defaults>
</compile_context>

<pallas_src>
import jax
import jax.numpy as jnp
from jax.experimental import pallas as pl
from jax.experimental.pallas import tpu as pltpu

_KEYS = ("year", "month", "day", "hour", "minute")
_NUM_FIELDS = len(_KEYS)
_IDX_COLS = 8            # stacked index columns (5 used, padded to 8)
_BLOCK_N_MAX = 1024      # token-axis tile (rows per grid step)


def _round_up(x, m):
    return ((x + m - 1) // m) * m


def _temporal_embedding_kernel(idx_ref, table_ref, out_ref):
    """idx_ref: (block_n, 8) int32 (offset-shifted indices, cols 0..4 used)
    table_ref: (V_pad, F) float32 combined table (VMEM-resident across grid)
    out_ref:   (block_n, F) float32
    """
    block_n = idx_ref.shape[0]
    v_pad = table_ref.shape[0]

    idx = idx_ref[...]                                             # (block_n, 8)
    # One shared iota for all 5 fields (VPU work done once, not 5x).
    cols = jax.lax.broadcasted_iota(jnp.int32, (block_n, v_pad), 1)

    # Multi-hot: exactly one 1 per field-row segment (offsets are disjoint).
    # Sum of one-hots == mathematical decomposition sum_k onehot_k @ table.
    multihot = (idx[:, 0:1] == cols).astype(jnp.float32)
    for k in range(1, _NUM_FIELDS):
        multihot = multihot + (idx[:, k:k + 1] == cols).astype(jnp.float32)

    # Single fused gather-as-matmul on the MXU.
    out_ref[...] = jnp.dot(multihot, table_ref[...],
                           preferred_element_type=jnp.float32)


def temporal_embedding(indices, tables):
    """indices: dict of int arrays [B, T]; tables: dict of [V_k, F] float32."""
    base_shape = indices["year"].shape
    n = 1
    for d in base_shape:
        n *= d
    feature_size = tables["year"].shape[1]

    # ---- combined table: concat rows, pad vocab axis to a multiple of 128 ----
    vocab_sizes = [tables[k].shape[0] for k in _KEYS]
    offsets = []
    acc = 0
    for v in vocab_sizes:
        offsets.append(acc)
        acc += v
    v_total = acc
    v_pad = _round_up(max(v_total, 128), 128)

    combined = jnp.concatenate([tables[k].astype(jnp.float32) for k in _KEYS],
                               axis=0)                              # (V_total, F)
    combined = jnp.pad(combined, ((0, v_pad - v_total), (0, 0)))    # (V_pad, F)

    # ---- stacked, offset-shifted indices: (N_pad, 8) int32 ----
    block_n = min(_BLOCK_N_MAX, _round_up(n, 8))
    n_pad = pl.cdiv(n, block_n) * block_n

    idx_cols = [indices[k].reshape(n).astype(jnp.int32) + offsets[i]
                for i, k in enumerate(_KEYS)]
    stacked = jnp.stack(idx_cols, axis=1)                           # (N, 5)
    stacked = jnp.pad(stacked,
                      ((0, n_pad - n), (0, _IDX_COLS - _NUM_FIELDS)),
                      constant_values=-1)                           # (N_pad, 8)

    grid = (n_pad // block_n,)

    out = pl.pallas_call(
        _temporal_embedding_kernel,
        out_shape=jax.ShapeDtypeStruct((n_pad, feature_size), jnp.float32),
        grid=grid,
        in_specs=[
            pl.BlockSpec((block_n, _IDX_COLS), lambda i: (i, 0)),     # indices tile
            pl.BlockSpec((v_pad, feature_size), lambda i: (0, 0)),    # whole table
        ],
        out_specs=pl.BlockSpec((block_n, feature_size), lambda i: (i, 0)),
        compiler_params=pltpu.CompilerParams(
            dimension_semantics=("parallel",),
            vmem_limit_bytes=32 * 1024 * 1024,
        ),
    )(stacked, combined)

    return out[:n].reshape(*base_shape, feature_size)


if __name__ == "__main__":
    # Module config: input_size = [n_year, n_month, n_day, n_hour, n_minute]
    input_size = [5, 13, 32, 24, 60]
    feature_size = 32
    B, T = 2, 8

    key = jax.random.PRNGKey(0)
    k_tabs = jax.random.split(key, 6)

    # Deterministic parameter init (nn.Embedding default: N(0, 1)).
    tables = {
        name: jax.random.normal(k_tabs[i], (input_size[i], feature_size),
                                jnp.float32)
        for i, name in enumerate(_KEYS)
    }

    # Deterministic integer index inputs, each [B, T] within its vocab range.
    k_idx = jax.random.split(k_tabs[5], 5)
    indices = {
        name: jax.random.randint(k_idx[i], (B, T), 0, input_size[i], jnp.int32)
        for i, name in enumerate(_KEYS)
    }

    out = temporal_embedding(indices, tables)
    out = jax.block_until_ready(out)

    # Reference check in plain JAX (table lookup + sum).
    ref = sum(tables[name][indices[name]] for name in _KEYS)
    assert out.shape == (B, T, feature_size), out.shape
    assert jnp.allclose(out, ref, atol=1e-5, rtol=1e-5), "mismatch vs reference"

    print("KERNEL_OK")
</pallas_src>

<mosaic_0001>
module attributes {stable_mosaic.version = 11 : i64} {
  func.func @_temporal_embedding_kernel(%arg0: i32, %arg1: memref<16x8xi32, #tpu.memory_space<vmem>>, %arg2: memref<256x32xf32, #tpu.memory_space<vmem>>, %arg3: memref<16x32xf32, #tpu.memory_space<vmem>>) attributes {dimension_semantics = [#tpu.dimension_semantics<parallel>], iteration_bounds = array<i64: 1>, scalar_prefetch = 0 : i64, scratch_operands = 0 : i64, tpu.core_type = #tpu.core_type<tc>, window_params = [{transform_indices = @transform_0, window_bounds = array<i64: 16, 8>}, {pipeline_mode = #tpu.pipeline_mode<synchronous>, transform_indices = @transform_1, window_bounds = array<i64: 256, 32>}, {transform_indices = @transform_2, window_bounds = array<i64: 16, 32>}]} {
    %c0 = arith.constant 0 : index
    %c0_0 = arith.constant 0 : index
    %0 = vector.load %arg1[%c0, %c0_0] : memref<16x8xi32, #tpu.memory_space<vmem>>, vector<16x8xi32>
    %1 = tpu.iota {dimensions = array<i32: 1>} : vector<16x256xi32>
    %2 = vector.extract_strided_slice %0 {offsets = [0, 0], sizes = [16, 1], strides = [1, 1]} : vector<16x8xi32> to vector<16x1xi32>
    %3 = vector.broadcast %2 : vector<16x1xi32> to vector<16x256xi32>
    %4 = arith.cmpi eq, %3, %1 : vector<16x256xi32>
    %5 = arith.extui %4 : vector<16x256xi1> to vector<16x256xi32>
    %6 = arith.sitofp %5 : vector<16x256xi32> to vector<16x256xf32>
    %7 = vector.extract_strided_slice %0 {offsets = [0, 1], sizes = [16, 1], strides = [1, 1]} : vector<16x8xi32> to vector<16x1xi32>
    %8 = vector.broadcast %7 : vector<16x1xi32> to vector<16x256xi32>
    %9 = arith.cmpi eq, %8, %1 : vector<16x256xi32>
    %10 = arith.extui %9 : vector<16x256xi1> to vector<16x256xi32>
    %11 = arith.sitofp %10 : vector<16x256xi32> to vector<16x256xf32>
    %12 = arith.addf %6, %11 : vector<16x256xf32>
    %13 = vector.extract_strided_slice %0 {offsets = [0, 2], sizes = [16, 1], strides = [1, 1]} : vector<16x8xi32> to vector<16x1xi32>
    %14 = vector.broadcast %13 : vector<16x1xi32> to vector<16x256xi32>
    %15 = arith.cmpi eq, %14, %1 : vector<16x256xi32>
    %16 = arith.extui %15 : vector<16x256xi1> to vector<16x256xi32>
    %17 = arith.sitofp %16 : vector<16x256xi32> to vector<16x256xf32>
    %18 = arith.addf %12, %17 : vector<16x256xf32>
    %19 = vector.extract_strided_slice %0 {offsets = [0, 3], sizes = [16, 1], strides = [1, 1]} : vector<16x8xi32> to vector<16x1xi32>
    %20 = vector.broadcast %19 : vector<16x1xi32> to vector<16x256xi32>
    %21 = arith.cmpi eq, %20, %1 : vector<16x256xi32>
    %22 = arith.extui %21 : vector<16x256xi1> to vector<16x256xi32>
    %23 = arith.sitofp %22 : vector<16x256xi32> to vector<16x256xf32>
    %24 = arith.addf %18, %23 : vector<16x256xf32>
    %25 = vector.extract_strided_slice %0 {offsets = [0, 4], sizes = [16, 1], strides = [1, 1]} : vector<16x8xi32> to vector<16x1xi32>
    %26 = vector.broadcast %25 : vector<16x1xi32> to vector<16x256xi32>
    %27 = arith.cmpi eq, %26, %1 : vector<16x256xi32>
    %28 = arith.extui %27 : vector<16x256xi1> to vector<16x256xi32>
    %29 = arith.sitofp %28 : vector<16x256xi32> to vector<16x256xf32>
    %30 = arith.addf %24, %29 : vector<16x256xf32>
    %c0_1 = arith.constant 0 : index
    %c0_2 = arith.constant 0 : index
    %31 = vector.load %arg2[%c0_1, %c0_2] : memref<256x32xf32, #tpu.memory_space<vmem>>, vector<256x32xf32>
    %cst = arith.constant dense<0.000000e+00> : vector<16x32xf32>
    %32 = tpu.matmul %30, %31, %cst {dimension_numbers = #tpu.dot_dimension_numbers<[1], [0], [0], [1], [0, 0, 1, 1], [], []>} : vector<16x256xf32>, vector<256x32xf32>, vector<16x32xf32> -> vector<16x32xf32>
    %c0_3 = arith.constant 0 : index
    %c0_4 = arith.constant 0 : index
    %33 = vector.load %arg3[%c0_3, %c0_4] : memref<16x32xf32, #tpu.memory_space<vmem>>, vector<16x32xf32>
    tpu.vector_store %arg3[%c0_3, %c0_4], %32 {strides = array<i32>} : memref<16x32xf32, #tpu.memory_space<vmem>>, vector<16x32xf32>,
    return
  }
  func.func @transform_0(%arg0: i32) -> (i32, i32) {
    %c0_i32 = arith.constant 0 : i32
    %c0_i32_0 = arith.constant 0 : i32
    return %arg0, %c0_i32 : i32, i32
  }
  func.func @transform_1(%arg0: i32) -> (i32, i32) {
    %c0_i32 = arith.constant 0 : i32
    %c0_i32_0 = arith.constant 0 : i32
    %c0_i32_1 = arith.constant 0 : i32
    return %c0_i32, %c0_i32_0 : i32, i32
  }
  func.func @transform_2(%arg0: i32) -> (i32, i32) {
    %c0_i32 = arith.constant 0 : i32
    %c0_i32_0 = arith.constant 0 : i32
    return %arg0, %c0_i32 : i32, i32
  }
}

</mosaic_0001>

<llo_original>
// kernel: tpu_custom_call.1
$region0: #{tpu_custom_call.1}
  #allocation0 [shape = 'u32[]', space=smem, size = 0x4, offset = 0x4, fixed_abs, tag = 'smem constant byte address 0x4 - core index']
  #allocation1 [shape = 'u32[144,128]{1,0:T(1,128)}', space=vmem, size = 0x12000, scoped, tag = 'internal scratch']
  %s0 = inlined_call_operand.vmem [shape: s32[16,8], index: 0, kind: input, shape index: {}]
  %s1 = inlined_call_operand.vmem [shape: f32[256,32], index: 1, kind: input, shape index: {}]
  %s2 = inlined_call_operand.hbm [shape: f32[16,32], index: 2, kind: output, shape index: {}]
  %s3 = sld [smem:[#allocation0]]
  $region18: #{tpu_custom_call.1} parent=0
    _
  %s5 = ssub.s32 1, %s3
  %s6 = scalar_select 0, %s5, %s3
  $region1: #{tpu_custom_call.1} parent=0
    #allocation2 [shape = 'u8[8192]{0}', space=vmem, size = 0x2000, scoped, tag = 'output window, operand 0, single buffered']
    #allocation3 [shape = 's32[1]{0}', space=sflag, size = 0x4, scoped, tag = 'scoped memory for tpu_custom_call.1']
    %7 = vsyncpa [#allocation3], 0
    // Predicated region
    $region2: #{tpu_custom_call.1} parent=1 // pred_check
      _
    $region3: #{tpu_custom_call.1} parent=1 // pred_check_branch
      %9 = sbr.rel (0) target = $region5
    $region4: #{tpu_custom_call.1} parent=1 // pred_region
      _
    $region5: #{tpu_custom_call.1} parent=1 // pred_fallthru
      _
    // Predicated region
    $region6: #{tpu_custom_call.1} parent=1 // pred_check
      _
    $region7: #{tpu_custom_call.1} parent=1 // pred_check_branch
      %11 = sbr.rel (0) target = $region9
    $region8: #{tpu_custom_call.1} parent=1 // pred_region
      _
    $region9: #{tpu_custom_call.1} parent=1 // pred_fallthru
      _
    %v12 = vld [vmem:[%s0] sm:$0xff]
    %v13 = vld [vmem:[%s0 + $0x8] sm:$0xff]
    %v14 = vlaneseq
    %v15 = vand.u32 %v14, 127
    %v16 = vadd.s32 %v15, 128
    %17 = vset.pattern.permute.xlu0 0
    %18 = vperm.xlu0 %17, %v12
    %v19 = vpop.permute.xlu0 %18
    %20 = vset.pattern.permute.xlu0 0
    %21 = vperm.xlu0 %20, %v13
    %v22 = vpop.permute.xlu0 %21
    %vm23 = vcmp.eq.s32.totalorder %v19, %v15
    %vm24 = vcmp.eq.s32.totalorder %v19, %v16
    %vm25 = vcmp.eq.s32.totalorder %v22, %v15
    %vm26 = vcmp.eq.s32.totalorder %v22, %v16
    %v27 = vsel %vm23, 1, 0
    %v28 = vsel %vm24, 1, 0
    %v29 = vsel %vm25, 1, 0
    %v30 = vsel %vm26, 1, 0
    %v31 = vcvt.s32.f32 %v27
    %v32 = vcvt.s32.f32 %v28
    %v33 = vcvt.s32.f32 %v29
    %v34 = vcvt.s32.f32 %v30
    %35 = vset.pattern.permute.xlu0 1
    %36 = vperm.xlu0 %35, %v12
    %v37 = vpop.permute.xlu0 %36
    %38 = vset.pattern.permute.xlu0 1
    %39 = vperm.xlu0 %38, %v13
    %v40 = vpop.permute.xlu0 %39
    %vm41 = vcmp.eq.s32.totalorder %v37, %v15
    %vm42 = vcmp.eq.s32.totalorder %v37, %v16
    %vm43 = vcmp.eq.s32.totalorder %v40, %v15
    %vm44 = vcmp.eq.s32.totalorder %v40, %v16
    %v45 = vsel %vm41, 1, 0
    %v46 = vsel %vm42, 1, 0
    %v47 = vsel %vm43, 1, 0
    %v48 = vsel %vm44, 1, 0
    %v49 = vcvt.s32.f32 %v45
    %v50 = vcvt.s32.f32 %v46
    %v51 = vcvt.s32.f32 %v47
    %v52 = vcvt.s32.f32 %v48
    %v53 = vadd.f32 %v31, %v49
    %v54 = vadd.f32 %v32, %v50
    %v55 = vadd.f32 %v33, %v51
    %v56 = vadd.f32 %v34, %v52
    %57 = vset.pattern.permute.xlu0 2
    %58 = vperm.xlu0 %57, %v12
    %v59 = vpop.permute.xlu0 %58
    %60 = vset.pattern.permute.xlu0 2
    %61 = vperm.xlu0 %60, %v13
    %v62 = vpop.permute.xlu0 %61
    %vm63 = vcmp.eq.s32.totalorder %v59, %v15
    %vm64 = vcmp.eq.s32.totalorder %v59, %v16
    %vm65 = vcmp.eq.s32.totalorder %v62, %v15
    %vm66 = vcmp.eq.s32.totalorder %v62, %v16
    %v67 = vsel %vm63, 1, 0
    %v68 = vsel %vm64, 1, 0
    %v69 = vsel %vm65, 1, 0
    %v70 = vsel %vm66, 1, 0
    %v71 = vcvt.s32.f32 %v67
    %v72 = vcvt.s32.f32 %v68
    %v73 = vcvt.s32.f32 %v69
    %v74 = vcvt.s32.f32 %v70
    %v75 = vadd.f32 %v53, %v71
    %v76 = vadd.f32 %v54, %v72
    %v77 = vadd.f32 %v55, %v73
    %v78 = vadd.f32 %v56, %v74
    %79 = vset.pattern.permute.xlu0 3
    %80 = vperm.xlu0 %79, %v12
    %v81 = vpop.permute.xlu0 %80
    %82 = vset.pattern.permute.xlu0 3
    %83 = vperm.xlu0 %82, %v13
    %v84 = vpop.permute.xlu0 %83
    %vm85 = vcmp.eq.s32.totalorder %v81, %v15
    %vm86 = vcmp.eq.s32.totalorder %v81, %v16
    %vm87 = vcmp.eq.s32.totalorder %v84, %v15
    %vm88 = vcmp.eq.s32.totalorder %v84, %v16
    %v89 = vsel %vm85, 1, 0
    %v90 = vsel %vm86, 1, 0
    %v91 = vsel %vm87, 1, 0
    %v92 = vsel %vm88, 1, 0
    %v93 = vcvt.s32.f32 %v89
    %v94 = vcvt.s32.f32 %v90
    %v95 = vcvt.s32.f32 %v91
    %v96 = vcvt.s32.f32 %v92
    %v97 = vadd.f32 %v75, %v93
    %v98 = vadd.f32 %v76, %v94
    %v99 = vadd.f32 %v77, %v95
    %v100 = vadd.f32 %v78, %v96
    %101 = vset.pattern.permute.xlu0 4
    %102 = vperm.xlu0 %101, %v12
    %v103 = vpop.permute.xlu0 %102
    %104 = vset.pattern.permute.xlu0 4
    %105 = vperm.xlu0 %104, %v13
    %v106 = vpop.permute.xlu0 %105
    %vm107 = vcmp.eq.s32.totalorder %v103, %v15
    %vm108 = vcmp.eq.s32.totalorder %v103, %v16
    %vm109 = vcmp.eq.s32.totalorder %v106, %v15
    %vm110 = vcmp.eq.s32.totalorder %v106, %v16
    %v111 = vsel %vm107, 1, 0
    %v112 = vsel %vm108, 1, 0
    %v113 = vsel %vm109, 1, 0
    %v114 = vsel %vm110, 1, 0
    %v115 = vcvt.s32.f32 %v111
    %v116 = vcvt.s32.f32 %v112
    %v117 = vcvt.s32.f32 %v113
    %v118 = vcvt.s32.f32 %v114
    %v119 = vadd.f32 %v97, %v115
    %v120 = vadd.f32 %v98, %v116
    %v121 = vadd.f32 %v99, %v117
    %v122 = vadd.f32 %v100, %v118
    %v123 = vld [vmem:[%s1] sm:$0xff]
    %v124 = vld [vmem:[%s1 + $0x8] sm:$0xff]
    %v125 = vld [vmem:[%s1 + $0x10] sm:$0xff]
    %v126 = vld [vmem:[%s1 + $0x18] sm:$0xff]
    %v127 = vld [vmem:[%s1 + $0x20] sm:$0xff]
    %v128 = vld [vmem:[%s1 + $0x28] sm:$0xff]
    %v129 = vld [vmem:[%s1 + $0x30] sm:$0xff]
    %v130 = vld [vmem:[%s1 + $0x38] sm:$0xff]
    %v131 = vld [vmem:[%s1 + $0x40] sm:$0xff]
    %v132 = vld [vmem:[%s1 + $0x48] sm:$0xff]
    %v133 = vld [vmem:[%s1 + $0x50] sm:$0xff]
    %v134 = vld [vmem:[%s1 + $0x58] sm:$0xff]
    %v135 = vld [vmem:[%s1 + $0x60] sm:$0xff]
    %v136 = vld [vmem:[%s1 + $0x68] sm:$0xff]
    %v137 = vld [vmem:[%s1 + $0x70] sm:$0xff]
    %v138 = vld [vmem:[%s1 + $0x78] sm:$0xff]
    %v139 = vld [vmem:[%s1 + $0x80] sm:$0xff]
    %v140 = vld [vmem:[%s1 + $0x88] sm:$0xff]
    %v141 = vld [vmem:[%s1 + $0x90] sm:$0xff]
    %v142 = vld [vmem:[%s1 + $0x98] sm:$0xff]
    %v143 = vld [vmem:[%s1 + $0xa0] sm:$0xff]
    %v144 = vld [vmem:[%s1 + $0xa8] sm:$0xff]
    %v145 = vld [vmem:[%s1 + $0xb0] sm:$0xff]
    %v146 = vld [vmem:[%s1 + $0xb8] sm:$0xff]
    %v147 = vld [vmem:[%s1 + $0xc0] sm:$0xff]
    %v148 = vld [vmem:[%s1 + $0xc8] sm:$0xff]
    %v149 = vld [vmem:[%s1 + $0xd0] sm:$0xff]
    %v150 = vld [vmem:[%s1 + $0xd8] sm:$0xff]
    %v151 = vld [vmem:[%s1 + $0xe0] sm:$0xff]
    %v152 = vld [vmem:[%s1 + $0xe8] sm:$0xff]
    %v153 = vld [vmem:[%s1 + $0xf0] sm:$0xff]
    %v154 = vld [vmem:[%s1 + $0xf8] sm:$0xff]
    %155 = vmatprep.subr.mxu0 0.0
    %156 = vmatpush1.msra.mxu0 %v123
    %157 = vmatprep.subr.mxu0 0.0
    %158 = vmatpush1.msra.mxu0 %v124
    %159 = vmatprep.subr.mxu0 0.0
    %160 = vmatpush1.msra.mxu0 %v125
    %161 = vmatprep.subr.mxu0 0.0
    %162 = vmatpush1.msra.mxu0 %v126
    %163 = vmatprep.subr.mxu0 0.0
    %164 = vmatpush1.msra.mxu0 %v127
    %165 = vmatprep.subr.mxu0 0.0
    %166 = vmatpush1.msra.mxu0 %v128
    %167 = vmatprep.subr.mxu0 0.0
    %168 = vmatpush1.msra.mxu0 %v129
    %169 = vmatprep.subr.mxu0 0.0
    %170 = vmatpush1.msra.mxu0 %v130
    %171 = vmatprep.subr.mxu0 0.0
    %172 = vmatpush1.msra.mxu0 %v131
    %173 = vmatprep.subr.mxu0 0.0
    %174 = vmatpush1.msra.mxu0 %v132
    %175 = vmatprep.subr.mxu0 0.0
    %176 = vmatpush1.msra.mxu0 %v133
    %177 = vmatprep.subr.mxu0 0.0
    %178 = vmatpush1.msra.mxu0 %v134
    %179 = vmatprep.subr.mxu0 0.0
    %180 = vmatpush1.msra.mxu0 %v135
    %181 = vmatprep.subr.mxu0 0.0
    %182 = vmatpush1.msra.mxu0 %v136
    %183 = vmatprep.subr.mxu0 0.0
    %184 = vmatpush1.msra.mxu0 %v137
    %185 = vmatprep.subr.mxu0 0.0
    %186 = vmatpush1.msra.mxu0 %v138
    %187 = vmatprep.subr.mxu0 0.0
    %188 = vmatpush1.msra.mxu0 %v139
    %189 = vmatprep.subr.mxu0 0.0
    %190 = vmatpush1.msra.mxu0 %v140
    %191 = vmatprep.subr.mxu0 0.0
    %192 = vmatpush1.msra.mxu0 %v141
    %193 = vmatprep.subr.mxu0 0.0
    %194 = vmatpush1.msra.mxu0 %v142
    %195 = vmatprep.subr.mxu0 0.0
    %196 = vmatpush1.msra.mxu0 %v143
    %197 = vmatprep.subr.mxu0 0.0
    %198 = vmatpush1.msra.mxu0 %v144
    %199 = vmatprep.subr.mxu0 0.0
    %200 = vmatpush1.msra.mxu0 %v145
    %201 = vmatprep.subr.mxu0 0.0
    %202 = vmatpush1.msra.mxu0 %v146
    %203 = vmatprep.subr.mxu0 0.0
    %204 = vmatpush1.msra.mxu0 %v147
    %205 = vmatprep.subr.mxu0 0.0
    %206 = vmatpush1.msra.mxu0 %v148
    %207 = vmatprep.subr.mxu0 0.0
    %208 = vmatpush1.msra.mxu0 %v149
    %209 = vmatprep.subr.mxu0 0.0
    %210 = vmatpush1.msra.mxu0 %v150
    %211 = vmatprep.subr.mxu0 0.0
    %212 = vmatpush1.msra.mxu0 %v151
    %213 = vmatprep.subr.mxu0 0.0
    %214 = vmatpush1.msra.mxu0 %v152
    %215 = vmatprep.subr.mxu0 0.0
    %216 = vmatpush1.msra.mxu0 %v153
    %217 = vmatprep.subr.mxu0 0.0
    %218 = vmatpush1.msra.mxu0 %v154
    %219 = vmatprep.mubr.f32.mxu0 %v120
    %220 = vmatmul.mubr.f32.gmra.mrb[0].mxu0 %v119
    %v221 = vpop.f32.mrb[0].mxu0
    %v222 = vadd.f32 0.0, %v221
    %v223 = vpop.f32.mrb[0].mxu0
    %224 = vmatprep.mubr.f32.mxu0 %v122
    %225 = vmatmul.mubr.f32.gmra.mrb[0].mxu0 %v121
    %v226 = vpop.f32.mrb[0].mxu0
    %v227 = vadd.f32 0.0, %v226
    %v228 = vpop.f32.mrb[0].mxu0
    %229 = vdwg.mxu0
    %vm230 = vcmask 261120
    %231 = vst.msk [vmem:[#allocation2] sm:$0xff] %vm230, %v222
    %232 = vst.msk [vmem:[#allocation2 + $0x8] sm:$0xff] %vm230, %v227
    // Predicated region
    $region10: #{tpu_custom_call.1} parent=1 // pred_check
      _
    $region11: #{tpu_custom_call.1} parent=1 // pred_check_branch
      %234 = sbr.rel (0) target = $region13
    $region12: #{tpu_custom_call.1} parent=1 // pred_region
      %s236 = ssub.s32 256, 256
      %237 = vsyncadd [#allocation3], %s236
      %s238 = sshll.u32 [#allocation2], 4
      %s239 = int_to_ptr.vmem [resolvable:$true] %s238
      %244 = dma.vmem_to_hbm [thread:$0]  %s239, 256, %s2, [#allocation3], 128, 128, 8
    $region13: #{tpu_custom_call.1} parent=1 // pred_fallthru
      _
    // Predicated region
    $region14: #{tpu_custom_call.1} parent=1 // pred_check
      _
    $region15: #{tpu_custom_call.1} parent=1 // pred_check_branch
      %246 = sbr.rel (0) target = $region17
    $region16: #{tpu_custom_call.1} parent=1 // pred_region
      %247 = dma.done [#allocation3], 256
    $region17: #{tpu_custom_call.1} parent=1 // pred_fallthru
      _
    %248 = vsyncpa [#allocation3], 1

</llo_original>
